<compile_context>
chip_gen: v7x
topology: tpu7x:2x2x1
jax: 0.10.0
libtpu: 0.0.40
codegen_flags: <defaults>
</compile_context>

<pallas_src>
import functools

import jax
import jax.numpy as jnp
from jax.experimental import pallas as pl
from jax.experimental.pallas import tpu as pltpu

_LANES = 128
_BF16_ROWS = 16  # bf16 packs 16 rows per sublane group


def _round_up(a, m):
    return ((a + m - 1) // m) * m


def _round_down(a, m):
    return max(m, (a // m) * m)


def _vmem_budget_bytes():
    """Generation-aware VMEM budget: 3/4 of physical VMEM, capped at 96 MiB."""
    try:
        phys = pltpu.get_tpu_info().vmem_capacity_bytes
    except Exception:
        phys = 64 * 1024 * 1024  # conservative (v7x-sized) fallback
    return int(min(96 * 1024 * 1024, (phys * 3) // 4))


def _mlp_softmax_kernel(x_ref, w1_ref, b1_ref, w2_ref, b2_ref, o_ref):
    # Hidden layer: (TB, E_pad) @ (E_pad, H_pad) on the MXU, bf16 in / f32 acc.
    x = x_ref[...].astype(jnp.bfloat16)  # no-op if the producer already gave bf16
    h = jnp.dot(x, w1_ref[...], preferred_element_type=jnp.float32)
    h = jax.nn.sigmoid(h + b1_ref[...])  # f32 epilogue (b1 is (1, H_pad))

    # Output layer: (TB, H_pad) @ (H_pad, O) on the MXU.
    logits = jnp.dot(h.astype(jnp.bfloat16), w2_ref[...],
                     preferred_element_type=jnp.float32)
    logits = logits + b2_ref[...]

    # Numerically stable softmax over the real O columns only, f32 throughout.
    m = jnp.max(logits, axis=-1, keepdims=True)
    e = jnp.exp(logits - m)
    s = jnp.sum(e, axis=-1, keepdims=True)
    # Exact divide so rows sum to 1 (approx reciprocal broke normalization).
    o_ref[...] = (e / s).astype(o_ref.dtype)


def prepare_params(w1, b1, w2, b2):
    """One-time (outside the hot path) parameter prep:

      * zero-pad E and H up to multiples of 128 (lane-dense MXU operands;
        padded H columns get b1=0 -> h=0.5, but the matching W2 rows are 0,
        so logits are unchanged),
      * pre-cast the weight matrices to bf16 once,
      * keep biases in f32 (v5e VPU has no bf16 path).
    """
    E, H = w1.shape
    O = w2.shape[1]
    E_pad = _round_up(E, _LANES)
    H_pad = _round_up(H, _LANES)

    w1_p = jnp.zeros((E_pad, H_pad), jnp.bfloat16).at[:E, :H].set(
        w1.astype(jnp.bfloat16))
    b1_p = jnp.zeros((1, H_pad), jnp.float32).at[0, :H].set(
        b1.astype(jnp.float32))
    w2_p = jnp.zeros((H_pad, O), jnp.bfloat16).at[:H, :].set(
        w2.astype(jnp.bfloat16))
    b2_p = b2.astype(jnp.float32).reshape(1, O)
    return w1_p, b1_p, w2_p, b2_p


def net_forward(x, params, *, batch_tile=1024):
    """Fused forward pass of Net.

    x:      (B, E) float32 or bfloat16
    params: output of prepare_params(w1, b1, w2, b2)
    returns (B, O) float32, rows sum to 1 (softmax over last dim).
    """
    w1_p, b1_p, w2_p, b2_p = params
    B, E = x.shape
    E_pad, H_pad = w1_p.shape
    O = w2_p.shape[1]
    assert E_pad == _round_up(E, _LANES), "params were prepared for a different E"

    # Lane-dense x: zero-pad E to E_pad (padded columns hit zero W1 rows).
    if E_pad != E:
        x = jnp.zeros((B, E_pad), x.dtype).at[:, :E].set(x)

    # ---- Batch tile selection ------------------------------------------------
    budget = _vmem_budget_bytes()
    x_bytes = jnp.dtype(x.dtype).itemsize
    # Single-buffered resident weights/biases + double-buffered x/out tiles.
    resident = E_pad * H_pad * 2 + H_pad * O * 2 + (H_pad + O) * 4
    per_row = 2 * (E_pad * x_bytes + O * 4)
    tb_cap = _round_down(max(_BF16_ROWS, (budget // 2 - resident) // max(per_row, 1)),
                         _BF16_ROWS)
    TB = max(_BF16_ROWS,
             min(_round_down(batch_tile, _BF16_ROWS),          # user cap
                 _round_up(pl.cdiv(B, 2), _BF16_ROWS),         # >=2 grid steps (v7x)
                 tb_cap))                                      # VMEM budget
    B_pad = _round_up(B, TB)
    if B_pad != B:
        x = jnp.zeros((B_pad, E_pad), x.dtype).at[:B, :].set(x)

    grid = (B_pad // TB,)
    resident_spec = dict(pipeline_mode=pl.Buffered(1))  # fetched once, 1 buffer

    out = pl.pallas_call(
        _mlp_softmax_kernel,
        out_shape=jax.ShapeDtypeStruct((B_pad, O), jnp.float32),
        grid_spec=pltpu.PrefetchScalarGridSpec(
            num_scalar_prefetch=0,
            grid=grid,
            in_specs=[
                pl.BlockSpec((TB, E_pad), lambda i: (i, 0)),               # x tile
                pl.BlockSpec((E_pad, H_pad), lambda i: (0, 0), **resident_spec),
                pl.BlockSpec((1, H_pad), lambda i: (0, 0), **resident_spec),
                pl.BlockSpec((H_pad, O), lambda i: (0, 0), **resident_spec),
                pl.BlockSpec((1, O), lambda i: (0, 0), **resident_spec),
            ],
            # Last dim equals the full array dim (allowed even when O < 128):
            # only the real O columns are written back to HBM.
            out_specs=pl.BlockSpec((TB, O), lambda i: (i, 0)),
        ),
        compiler_params=pltpu.CompilerParams(
            dimension_semantics=("parallel",),   # batch shards across v7x TCs
            vmem_limit_bytes=budget,             # ~48 MiB v7x / ~96 MiB v5e,v6e
        ),
    )(x, w1_p, b1_p, w2_p, b2_p)

    return out[:B] if B_pad != B else out


def init_params(key, embedding_dim, hidden_dim, output_dim):
    """Deterministic PyTorch-style (uniform +/-1/sqrt(fan_in)) init."""
    k1, k2, k3, k4 = jax.random.split(key, 4)
    bound1 = 1.0 / jnp.sqrt(embedding_dim)
    bound2 = 1.0 / jnp.sqrt(hidden_dim)
    w1 = jax.random.uniform(k1, (embedding_dim, hidden_dim), jnp.float32,
                            -bound1, bound1)
    b1 = jax.random.uniform(k2, (hidden_dim,), jnp.float32, -bound1, bound1)
    w2 = jax.random.uniform(k3, (hidden_dim, output_dim), jnp.float32,
                            -bound2, bound2)
    b2 = jax.random.uniform(k4, (output_dim,), jnp.float32, -bound2, bound2)
    return w1, b1, w2, b2


if __name__ == "__main__":
    # Small, module-consistent shapes: batch=8, embedding_dim=32,
    # hidden_dim=64, output_dim=16.
    batch, embedding_dim, hidden_dim, output_dim = 8, 32, 64, 16

    key = jax.random.PRNGKey(0)
    kx, kp = jax.random.split(key)
    x = jax.random.normal(kx, (batch, embedding_dim), jnp.float32)
    w1, b1, w2, b2 = init_params(kp, embedding_dim, hidden_dim, output_dim)

    params = prepare_params(w1, b1, w2, b2)   # one-time bf16 cast + lane padding
    out = jax.block_until_ready(net_forward(x, params))

    # Reference check in plain JAX (same math as the PyTorch module).
    # Tolerance is loosened because the MXU matmuls use bf16 inputs; the
    # softmax divide is exact, so row sums are 1 to f32 precision.
    h_ref = jax.nn.sigmoid(x @ w1 + b1)
    ref = jax.nn.softmax(h_ref @ w2 + b2, axis=-1)
    assert out.shape == (batch, output_dim)
    assert jnp.allclose(out, ref, atol=2e-2, rtol=2e-2)
    assert jnp.allclose(jnp.sum(out, axis=-1), 1.0, atol=1e-3)

    print("KERNEL_OK")
</pallas_src>

<mosaic_0001>
module attributes {stable_mosaic.version = 11 : i64} {
  func.func @_mlp_softmax_kernel(%arg0: i32, %arg1: memref<16x128xf32, #tpu.memory_space<vmem>>, %arg2: memref<128x128xbf16, #tpu.memory_space<vmem>>, %arg3: memref<1x128xf32, #tpu.memory_space<vmem>>, %arg4: memref<128x16xbf16, #tpu.memory_space<vmem>>, %arg5: memref<1x16xf32, #tpu.memory_space<vmem>>, %arg6: memref<16x16xf32, #tpu.memory_space<vmem>>) attributes {dimension_semantics = [#tpu.dimension_semantics<parallel>], iteration_bounds = array<i64: 1>, scalar_prefetch = 0 : i64, scratch_operands = 0 : i64, tpu.core_type = #tpu.core_type<tc>, window_params = [{transform_indices = @transform_0, window_bounds = array<i64: 16, 128>}, {pipeline_mode = #tpu.pipeline_mode<synchronous>, transform_indices = @transform_1, window_bounds = array<i64: 128, 128>}, {pipeline_mode = #tpu.pipeline_mode<synchronous>, transform_indices = @transform_2, window_bounds = array<i64: 1, 128>}, {pipeline_mode = #tpu.pipeline_mode<synchronous>, transform_indices = @transform_3, window_bounds = array<i64: 128, 16>}, {pipeline_mode = #tpu.pipeline_mode<synchronous>, transform_indices = @transform_4, window_bounds = array<i64: 1, 16>}, {transform_indices = @transform_5, window_bounds = array<i64: 16, 16>}]} {
    %c0 = arith.constant 0 : index
    %c0_0 = arith.constant 0 : index
    %0 = vector.load %arg1[%c0, %c0_0] : memref<16x128xf32, #tpu.memory_space<vmem>>, vector<16x128xf32>
    %1 = arith.truncf %0 : vector<16x128xf32> to vector<16x128xbf16>
    %c0_1 = arith.constant 0 : index
    %c0_2 = arith.constant 0 : index
    %2 = vector.load %arg2[%c0_1, %c0_2] : memref<128x128xbf16, #tpu.memory_space<vmem>>, vector<128x128xbf16>
    %cst = arith.constant dense<0.000000e+00> : vector<16x128xf32>
    %3 = tpu.matmul %1, %2, %cst {dimension_numbers = #tpu.dot_dimension_numbers<[1], [0], [0], [1], [0, 0, 1, 1], [], []>} : vector<16x128xbf16>, vector<128x128xbf16>, vector<16x128xf32> -> vector<16x128xf32>
    %c0_3 = arith.constant 0 : index
    %c0_4 = arith.constant 0 : index
    %4 = vector.load %arg3[%c0_3, %c0_4] : memref<1x128xf32, #tpu.memory_space<vmem>>, vector<1x128xf32>
    %5 = vector.broadcast %4 : vector<1x128xf32> to vector<16x128xf32>
    %6 = arith.addf %3, %5 : vector<16x128xf32>
    %7 = arith.negf %6 : vector<16x128xf32>
    %8 = math.exp %7 : vector<16x128xf32>
    %cst_5 = arith.constant 1.000000e+00 : f32
    %9 = vector.broadcast %cst_5 : f32 to vector<16x128xf32>
    %10 = arith.addf %9, %8 : vector<16x128xf32>
    %11 = arith.divf %9, %10 : vector<16x128xf32>
    %12 = arith.truncf %11 : vector<16x128xf32> to vector<16x128xbf16>
    %c0_6 = arith.constant 0 : index
    %c0_7 = arith.constant 0 : index
    %13 = vector.load %arg4[%c0_6, %c0_7] : memref<128x16xbf16, #tpu.memory_space<vmem>>, vector<128x16xbf16>
    %cst_8 = arith.constant dense<0.000000e+00> : vector<16x16xf32>
    %14 = tpu.matmul %12, %13, %cst_8 {dimension_numbers = #tpu.dot_dimension_numbers<[1], [0], [0], [1], [0, 0, 1, 1], [], []>} : vector<16x128xbf16>, vector<128x16xbf16>, vector<16x16xf32> -> vector<16x16xf32>
    %c0_9 = arith.constant 0 : index
    %c0_10 = arith.constant 0 : index
    %15 = vector.load %arg5[%c0_9, %c0_10] : memref<1x16xf32, #tpu.memory_space<vmem>>, vector<1x16xf32>
    %16 = vector.broadcast %15 : vector<1x16xf32> to vector<16x16xf32>
    %17 = arith.addf %14, %16 : vector<16x16xf32>
    %cst_11 = arith.constant dense<0xFF800000> : vector<16xf32>
    %18 = vector.multi_reduction <maximumf>, %17, %cst_11 [1] : vector<16x16xf32> to vector<16xf32>
    %19 = vector.shape_cast %18 : vector<16xf32> to vector<16x1xf32>
    %20 = vector.broadcast %19 : vector<16x1xf32> to vector<16x16xf32>
    %21 = arith.subf %17, %20 : vector<16x16xf32>
    %22 = math.exp %21 : vector<16x16xf32>
    %cst_12 = arith.constant dense<0.000000e+00> : vector<16xf32>
    %23 = vector.multi_reduction <add>, %22, %cst_12 [1] : vector<16x16xf32> to vector<16xf32>
    %24 = vector.shape_cast %23 : vector<16xf32> to vector<16x1xf32>
    %25 = vector.broadcast %24 : vector<16x1xf32> to vector<16x16xf32>
    %26 = arith.divf %22, %25 : vector<16x16xf32>
    %c0_13 = arith.constant 0 : index
    %c0_14 = arith.constant 0 : index
    %27 = vector.load %arg6[%c0_13, %c0_14] : memref<16x16xf32, #tpu.memory_space<vmem>>, vector<16x16xf32>
    tpu.vector_store %arg6[%c0_13, %c0_14], %26 {strides = array<i32>} : memref<16x16xf32, #tpu.memory_space<vmem>>, vector<16x16xf32>,
    return
  }
  func.func @transform_0(%arg0: i32) -> (i32, i32) {
    %c0_i32 = arith.constant 0 : i32
    %c0_i32_0 = arith.constant 0 : i32
    return %arg0, %c0_i32 : i32, i32
  }
  func.func @transform_1(%arg0: i32) -> (i32, i32) {
    %c0_i32 = arith.constant 0 : i32
    %c0_i32_0 = arith.constant 0 : i32
    %c0_i32_1 = arith.constant 0 : i32
    return %c0_i32, %c0_i32_0 : i32, i32
  }
  func.func @transform_2(%arg0: i32) -> (i32, i32) {
    %c0_i32 = arith.constant 0 : i32
    %c0_i32_0 = arith.constant 0 : i32
    %c0_i32_1 = arith.constant 0 : i32
    return %c0_i32, %c0_i32_0 : i32, i32
  }
  func.func @transform_3(%arg0: i32) -> (i32, i32) {
    %c0_i32 = arith.constant 0 : i32
    %c0_i32_0 = arith.constant 0 : i32
    %c0_i32_1 = arith.constant 0 : i32
    return %c0_i32, %c0_i32_0 : i32, i32
  }
  func.func @transform_4(%arg0: i32) -> (i32, i32) {
    %c0_i32 = arith.constant 0 : i32
    %c0_i32_0 = arith.constant 0 : i32
    %c0_i32_1 = arith.constant 0 : i32
    return %c0_i32, %c0_i32_0 : i32, i32
  }
  func.func @transform_5(%arg0: i32) -> (i32, i32) {
    %c0_i32 = arith.constant 0 : i32
    %c0_i32_0 = arith.constant 0 : i32
    return %arg0, %c0_i32 : i32, i32
  }
}

</mosaic_0001>

<llo_original>
// kernel: tpu_custom_call.1
$region0: #{tpu_custom_call.1}
  #allocation0 [shape = 'u32[]', space=smem, size = 0x4, offset = 0x4, fixed_abs, tag = 'smem constant byte address 0x4 - core index']
  #allocation1 [shape = 'u32[144,128]{1,0:T(1,128)}', space=vmem, size = 0x12000, scoped, tag = 'internal scratch']
  %s0 = inlined_call_operand.hbm [shape: f32[16,128], index: 0, kind: input, shape index: {}]
  %s1 = inlined_call_operand.vmem [shape: bf16[128,128], index: 1, kind: input, shape index: {}]
  %s2 = inlined_call_operand.vmem [shape: f32[1,128], index: 2, kind: input, shape index: {}]
  %s3 = inlined_call_operand.vmem [shape: bf16[128,16], index: 3, kind: input, shape index: {}]
  %s4 = inlined_call_operand.vmem [shape: f32[1,16], index: 4, kind: input, shape index: {}]
  %s5 = inlined_call_operand.hbm [shape: f32[16,16], index: 5, kind: output, shape index: {}]
  %s6 = sld [smem:[#allocation0]]
  $region34: #{tpu_custom_call.1} parent=0
    _
  %s8 = ssub.s32 1, %s6
  %s9 = scalar_select 0, %s8, %s6
  $region1: #{tpu_custom_call.1} parent=0
    #allocation2 [shape = 'u8[8192]{0}', space=vmem, size = 0x2000, scoped, tag = 'input window, operand 0, single buffered']
    #allocation3 [shape = 's32[1]{0}', space=sflag, size = 0x4, scoped, tag = 'scoped memory for tpu_custom_call.1']
    #allocation4 [shape = 's32[1]{0}', space=sflag, size = 0x4, scoped, tag = 'scoped memory for tpu_custom_call.1']
    #allocation5 [shape = 'u8[8192]{0}', space=vmem, size = 0x2000, scoped, tag = 'output window, operand 0, single buffered']
    %10 = vsyncpa [#allocation3], 0
    %11 = vsyncpa [#allocation4], 0
    // Predicated region
    $region2: #{tpu_custom_call.1} parent=1 // pred_check
      _
    $region3: #{tpu_custom_call.1} parent=1 // pred_check_branch
      %13 = sbr.rel (0) target = $region5
    $region4: #{tpu_custom_call.1} parent=1 // pred_region
      %s15 = ssub.s32 256, 256
      %16 = vsyncadd [#allocation3], %s15
      %s17 = sshll.u32 [#allocation2], 4
      %s18 = int_to_ptr.vmem [resolvable:$true] %s17
      %23 = dma.hbm_to_vmem [thread:$0]  %s0, 256, %s18, [#allocation3], 128, 128, 8
    $region5: #{tpu_custom_call.1} parent=1 // pred_fallthru
      _
    // Predicated region
    $region6: #{tpu_custom_call.1} parent=1 // pred_check
      _
    $region7: #{tpu_custom_call.1} parent=1 // pred_check_branch
      %25 = sbr.rel (0) target = $region9
    $region8: #{tpu_custom_call.1} parent=1 // pred_region
      _
    $region9: #{tpu_custom_call.1} parent=1 // pred_fallthru
      _
    // Predicated region
    $region10: #{tpu_custom_call.1} parent=1 // pred_check
      _
    $region11: #{tpu_custom_call.1} parent=1 // pred_check_branch
      %27 = sbr.rel (0) target = $region13
    $region12: #{tpu_custom_call.1} parent=1 // pred_region
      _
    $region13: #{tpu_custom_call.1} parent=1 // pred_fallthru
      _
    // Predicated region
    $region14: #{tpu_custom_call.1} parent=1 // pred_check
      _
    $region15: #{tpu_custom_call.1} parent=1 // pred_check_branch
      %29 = sbr.rel (0) target = $region17
    $region16: #{tpu_custom_call.1} parent=1 // pred_region
      _
    $region17: #{tpu_custom_call.1} parent=1 // pred_fallthru
      _
    // Predicated region
    $region18: #{tpu_custom_call.1} parent=1 // pred_check
      _
    $region19: #{tpu_custom_call.1} parent=1 // pred_check_branch
      %31 = sbr.rel (0) target = $region21
    $region20: #{tpu_custom_call.1} parent=1 // pred_region
      _
    $region21: #{tpu_custom_call.1} parent=1 // pred_fallthru
      _
    // Predicated region
    $region22: #{tpu_custom_call.1} parent=1 // pred_check
      _
    $region23: #{tpu_custom_call.1} parent=1 // pred_check_branch
      %33 = sbr.rel (0) target = $region25
    $region24: #{tpu_custom_call.1} parent=1 // pred_region
      %34 = dma.done [#allocation3], 256
    $region25: #{tpu_custom_call.1} parent=1 // pred_fallthru
      _
    %v36 = vld [vmem:[#allocation2] sm:$0xff]
    %v37 = vld [vmem:[#allocation2 + $0x8] sm:$0xff]
    %v38 = vpack.c.bf16 %v37, %v36
    %v39 = vld [vmem:[%s1] sm:$0xf]
    %v40 = vld [vmem:[%s1 + $0x4] sm:$0xf]
    %v41 = vld [vmem:[%s1 + $0x8] sm:$0xf]
    %v42 = vld [vmem:[%s1 + $0xc] sm:$0xf]
    %v43 = vld [vmem:[%s1 + $0x10] sm:$0xf]
    %v44 = vld [vmem:[%s1 + $0x14] sm:$0xf]
    %v45 = vld [vmem:[%s1 + $0x18] sm:$0xf]
    %v46 = vld [vmem:[%s1 + $0x1c] sm:$0xf]
    %v47 = vld [vmem:[%s1 + $0x20] sm:$0xf]
    %v48 = vld [vmem:[%s1 + $0x24] sm:$0xf]
    %v49 = vld [vmem:[%s1 + $0x28] sm:$0xf]
    %v50 = vld [vmem:[%s1 + $0x2c] sm:$0xf]
    %v51 = vld [vmem:[%s1 + $0x30] sm:$0xf]
    %v52 = vld [vmem:[%s1 + $0x34] sm:$0xf]
    %v53 = vld [vmem:[%s1 + $0x38] sm:$0xf]
    %v54 = vld [vmem:[%s1 + $0x3c] sm:$0xf]
    %v55 = vld [vmem:[%s2] sm:$0x1]
    %v57 = vlaneseq
    %v58 = vshrl.u32 %v57, 7
    %v59 = vsub.s32 0, %v58
    %v60 = vrot.slane %v55, %v59
    %v78 = vunpack.c.l.b16 %v39
    %v79 = vunpack.c.l.b16 %v40
    %v80 = vunpack.c.l.b16 %v41
    %v81 = vunpack.c.l.b16 %v42
    %v82 = vunpack.c.l.b16 %v43
    %v83 = vunpack.c.l.b16 %v44
    %v84 = vunpack.c.l.b16 %v45
    %v85 = vunpack.c.l.b16 %v46
    %v86 = vunpack.c.l.b16 %v47
    %v87 = vunpack.c.l.b16 %v48
    %v88 = vunpack.c.l.b16 %v49
    %v89 = vunpack.c.l.b16 %v50
    %v90 = vunpack.c.l.b16 %v51
    %v91 = vunpack.c.l.b16 %v52
    %v92 = vunpack.c.l.b16 %v53
    %v93 = vunpack.c.l.b16 %v54
    %v94 = vpack.c.b16 %v79, %v78
    %v95 = vpack.c.b16 %v81, %v80
    %v96 = vpack.c.b16 %v83, %v82
    %v97 = vpack.c.b16 %v85, %v84
    %v98 = vpack.c.b16 %v87, %v86
    %v99 = vpack.c.b16 %v89, %v88
    %v100 = vpack.c.b16 %v91, %v90
    %v101 = vpack.c.b16 %v93, %v92
    %110 = vmatprep.subr.bf16.mxu0 0
    %111 = vmatpush1.bf16.msra.mxu0 %v94
    %112 = vmatprep.subr.bf16.mxu0 0
    %113 = vmatpush1.bf16.msra.mxu0 %v95
    %114 = vmatprep.subr.bf16.mxu0 0
    %115 = vmatpush1.bf16.msra.mxu0 %v96
    %116 = vmatprep.subr.bf16.mxu0 0
    %117 = vmatpush1.bf16.msra.mxu0 %v97
    %118 = vmatprep.subr.bf16.mxu0 0
    %119 = vmatpush1.bf16.msra.mxu0 %v98
    %120 = vmatprep.subr.bf16.mxu0 0
    %121 = vmatpush1.bf16.msra.mxu0 %v99
    %122 = vmatprep.subr.bf16.mxu0 0
    %123 = vmatpush1.bf16.msra.mxu0 %v100
    %124 = vmatprep.subr.bf16.mxu0 0
    %125 = vmatpush1.bf16.msra.mxu0 %v101
    %126 = vmatprep.subr.bf16.mxu0 0
    %127 = vmatpush1.bf16.msra.mxu0 0
    %128 = vmatprep.subr.bf16.mxu0 0
    %129 = vmatpush1.bf16.msra.mxu0 0
    %130 = vmatprep.subr.bf16.mxu0 0
    %131 = vmatpush1.bf16.msra.mxu0 0
    %132 = vmatprep.subr.bf16.mxu0 0
    %133 = vmatpush1.bf16.msra.mxu0 0
    %134 = vmatprep.subr.bf16.mxu0 0
    %135 = vmatpush1.bf16.msra.mxu0 0
    %136 = vmatprep.subr.bf16.mxu0 0
    %137 = vmatpush1.bf16.msra.mxu0 0
    %138 = vmatprep.subr.bf16.mxu0 0
    %139 = vmatpush1.bf16.msra.mxu0 0
    %140 = vmatprep.subr.bf16.mxu0 0
    %141 = vmatpush1.bf16.msra.mxu0 0
    %142 = vmatprep.mubr.bf16.mxu0 0
    %143 = vmatmul.mubr.bf16.gmra.mrb[0].mxu0 %v38
    %v144 = vpop.f32.mrb[0].mxu0
    %v145 = vadd.f32 %v60, %v144
    %v146 = vpop.f32.mrb[0].mxu0
    %v147 = vpop.f32.mrb[0].mxu0
    %v148 = vadd.f32 %v60, %v147
    %v149 = vpop.f32.mrb[0].mxu0
    %150 = vdwg.mxu0
    %v151 = vxor.u32 %v145, 2147483648
    %v152 = vxor.u32 %v148, 2147483648
    %v153 = vmul.f32 %v151, 1.442695
    %v154 = vpow.pop %v153
    %v155 = vmul.f32 %v152, 1.442695
    %v156 = vpow.pop %v155
    %v157 = vadd.f32 %v154, 1.0
    %v158 = vadd.f32 %v156, 1.0
    %v159 = vrcp.pop %v157
    %v160 = vmul.f32 1.0, %v159
    %v161 = vrcp.pop %v158
    %v162 = vmul.f32 1.0, %v161
    %v163 = vpack.c.bf16 %v162, %v160
    %v164 = vld [vmem:[%s3] sm:$0xf]
    %v165 = vld [vmem:[%s3 + $0x4] sm:$0xf]
    %v166 = vld [vmem:[%s3 + $0x8] sm:$0xf]
    %v167 = vld [vmem:[%s3 + $0xc] sm:$0xf]
    %v168 = vld [vmem:[%s3 + $0x10] sm:$0xf]
    %v169 = vld [vmem:[%s3 + $0x14] sm:$0xf]
    %v170 = vld [vmem:[%s3 + $0x18] sm:$0xf]
    %v171 = vld [vmem:[%s3 + $0x1c] sm:$0xf]
    %v172 = vld [vmem:[%s3 + $0x20] sm:$0xf]
    %v173 = vld [vmem:[%s3 + $0x24] sm:$0xf]
    %v174 = vld [vmem:[%s3 + $0x28] sm:$0xf]
    %v175 = vld [vmem:[%s3 + $0x2c] sm:$0xf]
    %v176 = vld [vmem:[%s3 + $0x30] sm:$0xf]
    %v177 = vld [vmem:[%s3 + $0x34] sm:$0xf]
    %v178 = vld [vmem:[%s3 + $0x38] sm:$0xf]
    %v179 = vld [vmem:[%s3 + $0x3c] sm:$0xf]
    %v180 = vld [vmem:[%s4] sm:$0x1]
    %v182 = vlaneseq
    %v183 = vshrl.u32 %v182, 7
    %v184 = vsub.s32 0, %v183
    %v185 = vrot.slane %v180, %v184
    %v203 = vunpack.c.l.b16 %v164
    %v204 = vunpack.c.l.b16 %v165
    %v205 = vunpack.c.l.b16 %v166
    %v206 = vunpack.c.l.b16 %v167
    %v207 = vunpack.c.l.b16 %v168
    %v208 = vunpack.c.l.b16 %v169
    %v209 = vunpack.c.l.b16 %v170
    %v210 = vunpack.c.l.b16 %v171
    %v211 = vunpack.c.l.b16 %v172
    %v212 = vunpack.c.l.b16 %v173
    %v213 = vunpack.c.l.b16 %v174
    %v214 = vunpack.c.l.b16 %v175
    %v215 = vunpack.c.l.b16 %v176
    %v216 = vunpack.c.l.b16 %v177
    %v217 = vunpack.c.l.b16 %v178
    %v218 = vunpack.c.l.b16 %v179
    %v219 = vpack.c.b16 %v204, %v203
    %v220 = vpack.c.b16 %v206, %v205
    %v221 = vpack.c.b16 %v208, %v207
    %v222 = vpack.c.b16 %v210, %v209
    %v223 = vpack.c.b16 %v212, %v211
    %v224 = vpack.c.b16 %v214, %v213
    %v225 = vpack.c.b16 %v216, %v215
    %v226 = vpack.c.b16 %v218, %v217
    %235 = vmatprep.subr.bf16.mxu0 0
    %236 = vmatpush1.bf16.msra.mxu0 %v219
    %237 = vmatprep.subr.bf16.mxu0 0
    %238 = vmatpush1.bf16.msra.mxu0 %v220
    %239 = vmatprep.subr.bf16.mxu0 0
    %240 = vmatpush1.bf16.msra.mxu0 %v221
    %241 = vmatprep.subr.bf16.mxu0 0
    %242 = vmatpush1.bf16.msra.mxu0 %v222
    %243 = vmatprep.subr.bf16.mxu0 0
    %244 = vmatpush1.bf16.msra.mxu0 %v223
    %245 = vmatprep.subr.bf16.mxu0 0
    %246 = vmatpush1.bf16.msra.mxu0 %v224
    %247 = vmatprep.subr.bf16.mxu0 0
    %248 = vmatpush1.bf16.msra.mxu0 %v225
    %249 = vmatprep.subr.bf16.mxu0 0
    %250 = vmatpush1.bf16.msra.mxu0 %v226
    %251 = vmatprep.subr.bf16.mxu0 0
    %252 = vmatpush1.bf16.msra.mxu0 0
    %253 = vmatprep.subr.bf16.mxu0 0
    %254 = vmatpush1.bf16.msra.mxu0 0
    %255 = vmatprep.subr.bf16.mxu0 0
    %256 = vmatpush1.bf16.msra.mxu0 0
    %257 = vmatprep.subr.bf16.mxu0 0
    %258 = vmatpush1.bf16.msra.mxu0 0
    %259 = vmatprep.subr.bf16.mxu0 0
    %260 = vmatpush1.bf16.msra.mxu0 0
    %261 = vmatprep.subr.bf16.mxu0 0
    %262 = vmatpush1.bf16.msra.mxu0 0
    %263 = vmatprep.subr.bf16.mxu0 0
    %264 = vmatpush1.bf16.msra.mxu0 0
    %265 = vmatprep.subr.bf16.mxu0 0
    %266 = vmatpush1.bf16.msra.mxu0 0
    %267 = vmatprep.mubr.bf16.mxu0 0
    %268 = vmatmul.mubr.bf16.gmra.mrb[0].mxu0 %v163
    %v269 = vpop.f32.mrb[0].mxu0
    %v270 = vadd.f32 %v185, %v269
    %v271 = vpop.f32.mrb[0].mxu0
    %v272 = vpop.f32.mrb[0].mxu0
    %v273 = vadd.f32 %v185, %v272
    %v274 = vpop.f32.mrb[0].mxu0
    %275 = vdwg.mxu0
    %vm276 = vcmask 130048
    %v277 = vsel %vm276, %v270, -inf
    %278 = vmax.xlane.f32.xlu0 %v277
    %v279 = vpop.xlane.xlu0 %278
    %v280 = vsel %vm276, %v273, -inf
    %281 = vmax.xlane.f32.xlu0 %v280
    %v282 = vpop.xlane.xlu0 %281
    %v283 = vsub.f32 %v270, %v279
    %v284 = vsub.f32 %v273, %v282
    %v285 = vmul.f32 %v283, 1.442695
    %v286 = vpow.pop %v285
    %v287 = vmul.f32 %v284, 1.442695
    %v288 = vpow.pop %v287
    %v289 = vsel %vm276, %v286, 0.0
    %290 = vadd.xlane.f32.xlu0 %v289
    %v291 = vpop.xlane.xlu0 %290
    %v292 = vsel %vm276, %v288, 0.0
    %293 = vadd.xlane.f32.xlu0 %v292
    %v294 = vpop.xlane.xlu0 %293
    %v295 = vrcp.pop %v291
    %v296 = vmul.f32 %v286, %v295
    %v297 = vrcp.pop %v294
    %v298 = vmul.f32 %v288, %v297
    %299 = vst.msk [vmem:[#allocation5] sm:$0xff] %vm276, %v296
    %300 = vst.msk [vmem:[#allocation5 + $0x8] sm:$0xff] %vm276, %v298
    // Predicated region
    $region26: #{tpu_custom_call.1} parent=1 // pred_check
      _
    $region27: #{tpu_custom_call.1} parent=1 // pred_check_branch
      %302 = sbr.rel (0) target = $region29
    $region28: #{tpu_custom_call.1} parent=1 // pred_region
      %s304 = ssub.s32 256, 256
      %305 = vsyncadd [#allocation4], %s304
      %s306 = sshll.u32 [#allocation5], 4
      %s307 = int_to_ptr.vmem [resolvable:$true] %s306
      %312 = dma.vmem_to_hbm [thread:$0]  %s307, 256, %s5, [#allocation4], 128, 128, 8
    $region29: #{tpu_custom_call.1} parent=1 // pred_fallthru
      _
    // Predicated region
    $region30: #{tpu_custom_call.1} parent=1 // pred_check
      _
    $region31: #{tpu_custom_call.1} parent=1 // pred_check_branch
      %314 = sbr.rel (0) target = $region33
    $region32: #{tpu_custom_call.1} parent=1 // pred_region
      %315 = dma.done [#allocation4], 256
    $region33: #{tpu_custom_call.1} parent=1 // pred_fallthru
      _
    %316 = vsyncpa [#allocation3], 1
    %317 = vsyncpa [#allocation4], 1

</llo_original>
